<compile_context>
chip_gen: v7x
topology: tpu7x:2x2x1
jax: 0.10.0
libtpu: 0.0.40
codegen_flags: <defaults>
</compile_context>

<pallas_src>
import functools

import jax
import jax.numpy as jnp
from jax import lax
from jax.experimental import pallas as pl
from jax.experimental.pallas import tpu as pltpu

LRELU_SLOPE = 0.2
LN_EPS = 1e-5
N_TAPS = 27            # 3x3x3 conv taps
N_TAPS_PAD = 28        # padded to an even count -> full (16,128) bf16 tile stores


def _tap_offsets(D, H, W):
    """Flat-index offset of each of the 27 conv taps ((kd,kh,kw) row-major)."""
    offs = []
    for kd in range(3):
        for kh in range(3):
            for kw in range(3):
                offs.append((kd - 1) * H * W + (kh - 1) * W + (kw - 1))
    return offs


def _tap_masks(D, H, W):
    """(27, S) float32 validity masks implementing the 'same' zero padding."""
    d = jnp.arange(D)
    h = jnp.arange(H)
    w = jnp.arange(W)
    masks = []
    for kd in range(3):
        vd = ((d + kd - 1) >= 0) & ((d + kd - 1) < D)
        for kh in range(3):
            vh = ((h + kh - 1) >= 0) & ((h + kh - 1) < H)
            for kw in range(3):
                vw = ((w + kw - 1) >= 0) & ((w + kw - 1) < W)
                m = vd[:, None, None] & vh[None, :, None] & vw[None, None, :]
                masks.append(m.reshape(-1))
    return jnp.stack(masks, axis=0).astype(jnp.float32)


def rcab_kernel(x_ref, mask_ref, g_ref, be_ref, w1_ref, b1_ref, w2_ref, b2_ref,
                cw0_ref, cb0_ref, cw1t_ref, cb1_ref, o_ref,
                patch0_ref, patch1_ref, *, shifts, block_b):
    # x_ref block: (block_b, C, S) -- channel-major, lane-dense.
    C = x_ref.shape[1]
    inv_c = 1.0 / C
    patch_bufs = (patch0_ref, patch1_ref)   # double-buffered im2col scratch (bf16)

    def build_patch(v, patch_ref):
        # im2col: patch rows [t*C, (t+1)*C) = tap-t shifted copy of v with the
        # out-of-volume positions (zero 'same' padding) masked to 0.  Each tap
        # is one lane-rotation (XLU) + one masked multiply (VPU, f32); taps are
        # written in pairs so every store is one full (16,128) bf16 tile.
        zeros = jnp.zeros_like(v)

        def tap(t):
            if t >= N_TAPS:            # padded 28th tap -> zeros (zero weights too)
                return zeros
            shift = shifts[t]
            if shift == 0:             # center tap
                return v
            return pltpu.roll(v, shift=shift, axis=1) * mask_ref[pl.ds(t, 1), :]

        for p in range(N_TAPS_PAD // 2):
            pair = jnp.concatenate([tap(2 * p), tap(2 * p + 1)], axis=0)
            patch_ref[pl.ds(2 * p * C, 2 * C), :] = pair.astype(jnp.bfloat16)

    def conv3x3x3(patch_ref, w_ref, b_ref):
        # One MXU matmul: (C, 28C) x (28C, S) -> (C, S), bf16 operands, f32 acc.
        return jnp.dot(w_ref[...], patch_ref[...],
                       preferred_element_type=jnp.float32) + b_ref[...]

    # Static (unrolled) loop over the batch elements of this grid step; the two
    # patch buffers alternate between the two convs so element b+1's patch build
    # can overlap element b's second MXU dot.
    for bi in range(block_b):
        x = x_ref[bi].astype(jnp.float32)                  # (C, S)

        # ---- LayerNorm over the channel (sublane) axis, one pass, f32 ----
        mu = jnp.sum(x, axis=0, keepdims=True) * inv_c      # (1, S)
        ex2 = jnp.sum(x * x, axis=0, keepdims=True) * inv_c
        var = ex2 - mu * mu
        xn = (x - mu) * lax.rsqrt(var + LN_EPS)
        xn = xn * g_ref[...] + be_ref[...]                  # (C,S)*(C,1)+(C,1)

        # ---- conv1 -> LeakyReLU -> conv2 ----
        build_patch(xn, patch_bufs[0])
        y = conv3x3x3(patch_bufs[0], w1_ref, b1_ref)
        y = jnp.maximum(y, LRELU_SLOPE * y)                 # LeakyReLU, one max
        build_patch(y, patch_bufs[1])
        y = conv3x3x3(patch_bufs[1], w2_ref, b2_ref)

        # ---- channel attention (squeeze & excite): tiny, keep off the MXU ----
        pooled = jnp.mean(y, axis=1, keepdims=True)          # (C, 1)
        z = jnp.sum(pooled * cw0_ref[...], axis=0, keepdims=True) + cb0_ref[...]
        z = jnp.maximum(z, 0.0)                              # (1, Cr)
        wgt = jnp.sum(z * cw1t_ref[...], axis=1, keepdims=True) + cb1_ref[...]
        wgt = 1.0 / (1.0 + jnp.exp(-wgt))                    # sigmoid, (C, 1)

        # gate + residual, dense (C, S) store
        o_ref[bi] = (y * wgt + x).astype(o_ref.dtype)


def rcab_pallas(x, params, block_b=None):
    g, be, w1, b1, w2, b2, cw0, cb0, cw1, cb1 = params
    B, D, H, W, C = x.shape
    S = D * H * W
    Cr = cw0.shape[1]
    # Lane-dense layout needs S to be a lane multiple (true for the volumes
    # this block sees inside CorrXCA); general shapes would need S padding.
    assert S % 128 == 0, "D*H*W must be a multiple of 128 for the lane-dense layout"

    # Batch-block size: keep the "parallel" grid length >= 2 so v7x's two
    # TensorCores both get work, while batching >=2 elements per step where
    # possible so patch build and the MXU dot of adjacent elements can overlap.
    if block_b is None:
        block_b = B // 2 if (B >= 2 and B % 2 == 0) else 1
    assert B % block_b == 0, "batch must be divisible by the batch block size"

    # ---- wrapper-side layout plumbing (no compute hoisted out of the kernel) ----
    x_cs = jnp.transpose(x, (0, 4, 1, 2, 3)).reshape(B, C, S)      # (B, C, S)

    def flat_w(w):
        # (3,3,3,Cin,Cout) -> (Cout, 28*Cin): single-matmul LHS, tap-major
        # columns matching the im2col patch rows, zero-padded 28th tap; bf16
        # operands for the MXU (accumulation stays f32 in-kernel).
        wf = jnp.transpose(w.reshape(N_TAPS, C, C), (2, 0, 1)).reshape(C, N_TAPS * C)
        wf = jnp.pad(wf, ((0, 0), (0, (N_TAPS_PAD - N_TAPS) * C)))
        return wf.astype(jnp.bfloat16)

    w1f, w2f = flat_w(w1), flat_w(w2)
    gc, bec = g.reshape(C, 1), be.reshape(C, 1)
    b1c, b2c = b1.reshape(C, 1), b2.reshape(C, 1)
    cb0r = cb0.reshape(1, Cr)
    cw1t, cb1c = cw1.T, cb1.reshape(C, 1)                          # (C,Cr), (C,1)
    masks = _tap_masks(D, H, W)                                    # (27, S)

    # Static lane-roll amount per tap.  pltpu.roll follows the jnp.roll
    # convention out[i] = in[(i - shift) % n]; we need rolled[:, s] ==
    # v[:, (s + off) % S], hence shift = (-off) % S.  Guarded by a unit test
    # in __main__ (no cached runtime probe).
    shifts = tuple((-off) % S for off in _tap_offsets(D, H, W))

    def rep(shape):
        return pl.BlockSpec(shape, lambda b, _n=len(shape): (0,) * _n)

    grid_spec = pltpu.PrefetchScalarGridSpec(
        num_scalar_prefetch=0,
        grid=(B // block_b,),
        in_specs=[
            pl.BlockSpec((block_b, C, S), lambda b: (b, 0, 0)),  # x (channel-major)
            rep((N_TAPS, S)),                                    # tap validity masks
            rep((C, 1)), rep((C, 1)),                            # LN gamma, beta
            rep((C, N_TAPS_PAD * C)), rep((C, 1)),               # conv1 w (flat bf16), b
            rep((C, N_TAPS_PAD * C)), rep((C, 1)),               # conv2 w (flat bf16), b
            rep((C, Cr)), rep((1, Cr)),                          # CA conv0 w, b
            rep((C, Cr)), rep((C, 1)),                           # CA conv1 w^T, b
        ],
        out_specs=pl.BlockSpec((block_b, C, S), lambda b: (b, 0, 0)),
        scratch_shapes=[
            pltpu.VMEM((N_TAPS_PAD * C, S), jnp.bfloat16),       # im2col patch, buf 0
            pltpu.VMEM((N_TAPS_PAD * C, S), jnp.bfloat16),       # im2col patch, buf 1
        ],
    )
    out_cs = pl.pallas_call(
        functools.partial(rcab_kernel, shifts=shifts, block_b=block_b),
        out_shape=jax.ShapeDtypeStruct((B, C, S), x.dtype),
        grid_spec=grid_spec,
        compiler_params=pltpu.CompilerParams(dimension_semantics=("parallel",)),
    )(x_cs, masks, gc, bec, w1f, b1c, w2f, b2c, cw0, cb0r, cw1t, cb1c)

    return jnp.transpose(out_cs.reshape(B, C, D, H, W), (0, 2, 3, 4, 1))


def rcab_reference(x, params, conv_dtype=jnp.float32):
    """Pure-JAX (XLA) reference mirroring the PyTorch module's semantics.

    conv_dtype=jnp.bfloat16 reproduces the kernel's bf16 MXU operands
    (accumulation stays f32) for a tight numerical comparison.
    """
    g, be, w1, b1, w2, b2, cw0, cb0, cw1, cb1 = params
    mu = x.mean(-1, keepdims=True)
    var = ((x - mu) ** 2).mean(-1, keepdims=True)
    xn = (x - mu) / jnp.sqrt(var + LN_EPS) * g.reshape(-1) + be.reshape(-1)
    xt = jnp.transpose(xn, (0, 4, 1, 2, 3))              # NCDHW

    def conv(v, w, b):
        w_oidhw = jnp.transpose(w, (4, 3, 0, 1, 2))      # (kd,kh,kw,Ci,Co) -> (O,I,D,H,W)
        y = lax.conv_general_dilated(
            v.astype(conv_dtype), w_oidhw.astype(conv_dtype),
            (1, 1, 1), 'SAME',
            dimension_numbers=('NCDHW', 'OIDHW', 'NCDHW'),
            preferred_element_type=jnp.float32)
        return y + b.reshape(1, -1, 1, 1, 1)

    y = conv(xt, w1, b1)
    y = jnp.where(y >= 0, y, LRELU_SLOPE * y)
    y = conv(y, w2, b2)
    y = jnp.transpose(y, (0, 2, 3, 4, 1))                # back to channels-last
    pooled = y.mean(axis=(1, 2, 3), keepdims=True)       # (B,1,1,1,C)
    z = jnp.maximum(pooled @ cw0 + cb0.reshape(-1), 0.0)
    w = jax.nn.sigmoid(z @ cw1 + cb1.reshape(-1))
    return y * w + x


def _check_roll_convention():
    """Unit test pinning pltpu.roll to the jnp.roll convention."""
    def probe(x_ref, o_ref):
        o_ref[...] = pltpu.roll(x_ref[...], shift=3, axis=1)

    xt = jnp.tile(jnp.arange(128, dtype=jnp.float32)[None, :], (8, 1))
    got = pl.pallas_call(
        probe, out_shape=jax.ShapeDtypeStruct((8, 128), jnp.float32))(xt)
    if not bool(jnp.array_equal(got, jnp.roll(xt, 3, axis=1))):
        raise AssertionError("pltpu.roll no longer follows the jnp.roll convention")


if __name__ == "__main__":
    # TODO(synk): use_checkpoint (gradient checkpointing) is a training-time
    # memory optimization with no effect on forward semantics; omitted.
    B, D, H, W, C = 4, 8, 8, 8, 8
    reduction = 4
    Cr = C // reduction

    keys = jax.random.split(jax.random.PRNGKey(0), 12)
    x = jax.random.normal(keys[0], (B, D, H, W, C), jnp.float32)
    g = 1.0 + 0.1 * jax.random.normal(keys[1], (1, C), jnp.float32)   # LN gamma
    be = 0.1 * jax.random.normal(keys[2], (1, C), jnp.float32)        # LN beta
    w1 = 0.1 * jax.random.normal(keys[3], (3, 3, 3, C, C), jnp.float32)
    b1 = 0.1 * jax.random.normal(keys[4], (1, C), jnp.float32)
    w2 = 0.1 * jax.random.normal(keys[5], (3, 3, 3, C, C), jnp.float32)
    b2 = 0.1 * jax.random.normal(keys[6], (1, C), jnp.float32)
    cw0 = 0.1 * jax.random.normal(keys[7], (C, Cr), jnp.float32)
    cb0 = 0.1 * jax.random.normal(keys[8], (1, Cr), jnp.float32)
    cw1 = 0.1 * jax.random.normal(keys[9], (Cr, C), jnp.float32)
    cb1 = 0.1 * jax.random.normal(keys[10], (1, C), jnp.float32)
    params = (g, be, w1, b1, w2, b2, cw0, cb0, cw1, cb1)

    # Guard the roll convention the kernel's static tap shifts are built on.
    _check_roll_convention()

    out = jax.block_until_ready(rcab_pallas(x, params))
    assert out.shape == x.shape and out.dtype == x.dtype

    # Tight check vs a reference that also rounds the conv operands to bf16
    # (the kernel uses bf16 MXU operands with f32 accumulation).
    ref_bf16 = jax.block_until_ready(rcab_reference(x, params, jnp.bfloat16))
    err_bf16 = float(jnp.max(jnp.abs(out - ref_bf16)))
    if not jnp.allclose(out, ref_bf16, atol=1e-2, rtol=1e-2):
        raise AssertionError(
            f"Pallas/bf16-conv reference mismatch, max abs err = {err_bf16}")

    # Sanity check vs the pure-f32 reference (bf16 operand rounding contributes
    # ~1e-2 absolute error at these activation magnitudes).
    ref_f32 = jax.block_until_ready(rcab_reference(x, params))
    err_f32 = float(jnp.max(jnp.abs(out - ref_f32)))
    if not jnp.allclose(out, ref_f32, atol=6e-2, rtol=6e-2):
        raise AssertionError(
            f"Pallas/f32 reference mismatch, max abs err = {err_f32}")

    print("KERNEL_OK")
</pallas_src>

<mosaic_0001>
module attributes {stable_mosaic.version = 11 : i64} {
  func.func @probe(%arg0: memref<8x128xf32, #tpu.memory_space<vmem>>, %arg1: memref<8x128xf32, #tpu.memory_space<vmem>>) attributes {dimension_semantics = [], scalar_prefetch = 0 : i64, scratch_operands = 0 : i64, tpu.core_type = #tpu.core_type<tc>} {
    %c0 = arith.constant 0 : index
    %c0_0 = arith.constant 0 : index
    %0 = vector.load %arg0[%c0, %c0_0] : memref<8x128xf32, #tpu.memory_space<vmem>>, vector<8x128xf32>
    %c3_i32 = arith.constant 3 : i32
    %1 = tpu.dynamic_rotate %0 by %c3_i32 dim 1 : vector<8x128xf32>, i32 -> vector<8x128xf32>
    %c0_1 = arith.constant 0 : index
    %c0_2 = arith.constant 0 : index
    %2 = vector.load %arg1[%c0_1, %c0_2] : memref<8x128xf32, #tpu.memory_space<vmem>>, vector<8x128xf32>
    tpu.vector_store %arg1[%c0_1, %c0_2], %1 {strides = array<i32>} : memref<8x128xf32, #tpu.memory_space<vmem>>, vector<8x128xf32>,
    return
  }
}

</mosaic_0001>

<llo_original>
// kernel: tpu_custom_call.1
$region0: #{tpu_custom_call.1}
  #allocation0 [shape = 'u32[]', space=smem, size = 0x4, offset = 0x4, fixed_abs, tag = 'smem constant byte address 0x4 - core index']
  #allocation1 [shape = 'u32[144,128]{1,0:T(1,128)}', space=vmem, size = 0x12000, scoped, tag = 'internal scratch']
  %s0 = inlined_call_operand.hbm [shape: f32[8,128], index: 0, kind: input, shape index: {}]
  %s1 = inlined_call_operand.hbm [shape: f32[8,128], index: 1, kind: output, shape index: {}]
  %s2 = sld [smem:[#allocation0]]
  $region18: #{tpu_custom_call.1} parent=0
    _
  %s4 = ssub.s32 1, %s2
  %s5 = scalar_select 0, %s4, %s2
  $region1: #{tpu_custom_call.1} parent=0
    #allocation2 [shape = 'u8[4096]{0}', space=vmem, size = 0x1000, scoped, tag = 'input window, operand 0, single buffered']
    #allocation3 [shape = 's32[1]{0}', space=sflag, size = 0x4, scoped, tag = 'scoped memory for tpu_custom_call.1']
    #allocation4 [shape = 's32[1]{0}', space=sflag, size = 0x4, scoped, tag = 'scoped memory for tpu_custom_call.1']
    #allocation5 [shape = 'u8[4096]{0}', space=vmem, size = 0x1000, scoped, tag = 'output window, operand 0, single buffered']
    %6 = vsyncpa [#allocation3], 0
    %7 = vsyncpa [#allocation4], 0
    // Predicated region
    $region2: #{tpu_custom_call.1} parent=1 // pred_check
      _
    $region3: #{tpu_custom_call.1} parent=1 // pred_check_branch
      %9 = sbr.rel (0) target = $region5
    $region4: #{tpu_custom_call.1} parent=1 // pred_region
      %s11 = ssub.s32 128, 128
      %12 = vsyncadd [#allocation3], %s11
      %s14 = sshll.u32 [#allocation2], 4
      %s15 = int_to_ptr.vmem [resolvable:$true] %s14
      %17 = dma.hbm_to_vmem [thread:$0]  %s0, 128, %s15, [#allocation3]
    $region5: #{tpu_custom_call.1} parent=1 // pred_fallthru
      _
    // Predicated region
    $region6: #{tpu_custom_call.1} parent=1 // pred_check
      _
    $region7: #{tpu_custom_call.1} parent=1 // pred_check_branch
      %19 = sbr.rel (0) target = $region9
    $region8: #{tpu_custom_call.1} parent=1 // pred_region
      %20 = dma.done [#allocation3], 128
    $region9: #{tpu_custom_call.1} parent=1 // pred_fallthru
      _
    %v21 = vld [vmem:[#allocation2] sm:$0xff]
    %22 = vrot.lane.b32.xlu0 %v21, 3
    %v23 = vpop.permute.xlu0 %22
    %24 = vst [vmem:[#allocation5] sm:$0xff] %v23
    // Predicated region
    $region10: #{tpu_custom_call.1} parent=1 // pred_check
      _
    $region11: #{tpu_custom_call.1} parent=1 // pred_check_branch
      %26 = sbr.rel (0) target = $region13
    $region12: #{tpu_custom_call.1} parent=1 // pred_region
      %s28 = ssub.s32 128, 128
      %29 = vsyncadd [#allocation4], %s28
      %s31 = sshll.u32 [#allocation5], 4
      %s32 = int_to_ptr.vmem [resolvable:$true] %s31
      %34 = dma.vmem_to_hbm [thread:$0]  %s32, 128, %s1, [#allocation4]
    $region13: #{tpu_custom_call.1} parent=1 // pred_fallthru
      _
    // Predicated region
    $region14: #{tpu_custom_call.1} parent=1 // pred_check
      _
    $region15: #{tpu_custom_call.1} parent=1 // pred_check_branch
      %36 = sbr.rel (0) target = $region17
    $region16: #{tpu_custom_call.1} parent=1 // pred_region
      %37 = dma.done [#allocation4], 128
    $region17: #{tpu_custom_call.1} parent=1 // pred_fallthru
      _
    %38 = vsyncpa [#allocation3], 1
    %39 = vsyncpa [#allocation4], 1

</llo_original>
